<compile_context>
chip_gen: v7x
topology: tpu7x:2x2x1
jax: 0.10.0
libtpu: 0.0.40
codegen_flags: <defaults>
</compile_context>

<pallas_src>
import math
from functools import partial

import jax
import jax.numpy as jnp
from jax.experimental import pallas as pl
from jax.experimental.pallas import tpu as pltpu


def _vmem_capacity_bytes():
    """Per-core VMEM capacity; generation-aware with a conservative fallback."""
    try:
        return int(pltpu.get_tpu_info().vmem_capacity_bytes)
    except Exception:
        return 64 << 20  # v7x per-TC physical size: smallest across supported chips


def _estimate_vmem_bytes(tb, seq, d_model, n_heads):
    """Rough per-grid-step VMEM footprint: double-buffered x/ts/out blocks, in-kernel
    f32 temporaries (fused qkv = 3x, bf16 copies, ctx, output accumulator, scores) and
    double-buffered bf16 weights + f32 row vectors."""
    rows = tb * seq
    f32 = 4
    act = rows * d_model * f32
    io = 2 * (act + rows * f32) + 2 * act                 # x + ts blocks, out block (x2 buffers)
    temps = 6 * act + rows * seq * f32                    # qkv(3x) + casts + acc + scores
    weights = 2 * 2 * (3 * d_model * d_model + d_model * d_model)   # bf16 w_qkv + wo, 2 buffers
    rowvecs = 2 * (2 * 3 * d_model + d_model) * f32
    return io + temps + weights + rowvecs


def _pick_tb(B, seq, d_model, n_heads, vmem_budget):
    """Largest divisor of B that (a) keeps >= 2 grid steps when B >= 2 (v7x megacore),
    (b) fits the VMEM budget, (c) stops growing once tb*seq >= 512 rows (MXU well fed)."""
    tb_cap = B if B < 2 else max(1, B // 2)
    best = 1
    for tb in range(1, tb_cap + 1):
        if B % tb:
            continue
        if _estimate_vmem_bytes(tb, seq, d_model, n_heads) > vmem_budget:
            break
        best = tb
        if tb * seq >= 512:
            break
    return best


def _temporal_attn_kernel(x_ref, ts_ref, w_qkv_ref, tb_qkv_ref, wo_ref, bo_ref, o_ref,
                          *, tb, seq, d_model, n_heads, head_dim):
    rows = tb * seq

    x = x_ref[...]                                    # (rows, D) f32
    ts = ts_ref[...]                                  # (rows, 1) f32
    tbq = tb_qkv_ref[...]                             # (2, 3D) f32: [time_row; bias_row]

    # ---- fused Q|K|V projection: one MXU matmul, bf16 operands, f32 accumulation ----
    qkv = jnp.dot(x.astype(jnp.bfloat16), w_qkv_ref[...],
                  preferred_element_type=jnp.float32)                 # (rows, 3D)
    # rank-1 time embedding (Q/K only; V's time row is zero) + folded biases, all f32
    qkv = qkv + ts * tbq[0:1, :] + tbq[1:2, :]

    sm_scale = 1.0 / math.sqrt(head_dim)
    out = None
    # Static unroll over heads; each head is a 3-D contraction batched over the TB fold.
    for h in range(n_heads):
        lo = h * head_dim
        qh = qkv[:, lo:lo + head_dim]
        kh = qkv[:, d_model + lo:d_model + lo + head_dim]
        vh = qkv[:, 2 * d_model + lo:2 * d_model + lo + head_dim]
        # leading-dim reshape while f32 (seq multiple of the f32 sublane tile), then cast
        qh = qh.reshape(tb, seq, head_dim).astype(jnp.bfloat16)
        kh = kh.reshape(tb, seq, head_dim).astype(jnp.bfloat16)
        vh = vh.reshape(tb, seq, head_dim).astype(jnp.bfloat16)

        s = jnp.einsum('bqd,bkd->bqk', qh, kh,
                       preferred_element_type=jnp.float32) * sm_scale     # (tb, S, S)
        s = s - jnp.max(s, axis=-1, keepdims=True)
        p = jnp.exp(s)                                                     # f32 softmax
        p = p * pl.reciprocal(jnp.sum(p, axis=-1, keepdims=True), approx=True)
        ctx_h = jnp.einsum('bqk,bkd->bqd', p.astype(jnp.bfloat16), vh,
                           preferred_element_type=jnp.float32)             # (tb, S, hd)

        # accumulate the output projection per head -> no lane-dimension head concat
        contrib = jnp.dot(ctx_h.reshape(rows, head_dim).astype(jnp.bfloat16),
                          wo_ref[lo:lo + head_dim, :],
                          preferred_element_type=jnp.float32)              # (rows, D)
        out = contrib if out is None else out + contrib

    out = out + bo_ref[...]
    o_ref[...] = out.astype(o_ref.dtype)


def temporal_attention(x, timestamps, params, n_heads):
    """x: (B, S, D) float32, timestamps: (B, S) float32 -> (B, S, D) float32."""
    B, S, D = x.shape
    assert D % n_heads == 0
    head_dim = D // n_heads

    vmem_cap = _vmem_capacity_bytes()
    TB = _pick_tb(B, S, D, n_heads, int(vmem_cap * 0.6))
    rows_blk = TB * S
    est = _estimate_vmem_bytes(TB, S, D, n_heads)
    vmem_limit = min(int(vmem_cap * 0.75), max(32 << 20, 4 * est))

    # ---- host-side parameter plumbing (glue, plain JAX) ----
    xf = x.reshape(B * S, D).astype(jnp.float32)
    tsf = timestamps.reshape(B * S, 1).astype(jnp.float32)

    wt_row = params["time_w"].reshape(1, D).astype(jnp.float32)   # Linear(1, D).weight -> (1, D)
    bt_row = params["time_b"].reshape(1, D).astype(jnp.float32)
    scale = params["time_scale"].astype(jnp.float32)[0]

    wq, wk, wv = jnp.split(params["in_w"].astype(jnp.float32), 3, axis=0)   # each (D, D)
    bq, bk, bv = jnp.split(params["in_b"].astype(jnp.float32), 3)           # each (D,)
    wq_t, wk_t, wv_t = wq.T, wk.T, wv.T                                     # (D_in, D_out)

    # fold te = scale*(ts*wt + bt) through the Q/K projections (rank-1 in features), f32
    wq_time = scale * (wt_row @ wq_t)                              # (1, D)
    wk_time = scale * (wt_row @ wk_t)
    bq_adj = bq.reshape(1, D) + scale * (bt_row @ wq_t)
    bk_adj = bk.reshape(1, D) + scale * (bt_row @ wk_t)

    w_qkv = jnp.concatenate([wq_t, wk_t, wv_t], axis=1).astype(jnp.bfloat16)   # (D, 3D)
    time_row = jnp.concatenate([wq_time, wk_time,
                                jnp.zeros((1, D), jnp.float32)], axis=1)       # V: no time term
    bias_row = jnp.concatenate([bq_adj, bk_adj, bv.reshape(1, D)], axis=1)
    tb_qkv = jnp.concatenate([time_row, bias_row], axis=0)                     # (2, 3D) f32

    wo_t = params["out_w"].T.astype(jnp.bfloat16)                  # (D, D)
    bo = params["out_b"].reshape(1, D).astype(jnp.float32)

    kernel = partial(_temporal_attn_kernel, tb=TB, seq=S, d_model=D,
                     n_heads=n_heads, head_dim=head_dim)

    def full(shape):
        n = len(shape)
        return pl.BlockSpec(shape, lambda b, _n=n: (0,) * _n)

    out_flat = pl.pallas_call(
        kernel,
        out_shape=jax.ShapeDtypeStruct((B * S, D), x.dtype),
        grid=(B // TB,),
        in_specs=[
            pl.BlockSpec((rows_blk, D), lambda b: (b, 0)),     # x (flat row blocks)
            pl.BlockSpec((rows_blk, 1), lambda b: (b, 0)),     # timestamps
            full((D, 3 * D)),                                  # fused Wq^T|Wk^T|Wv^T (bf16)
            full((2, 3 * D)),                                  # [time_row; bias_row] (f32)
            full((D, D)),                                      # Wo^T (bf16)
            full((1, D)),                                      # out bias (f32)
        ],
        out_specs=pl.BlockSpec((rows_blk, D), lambda b: (b, 0)),
        compiler_params=pltpu.CompilerParams(
            dimension_semantics=("parallel",),                 # independent batch-row blocks
            vmem_limit_bytes=vmem_limit),
    )(xf, tsf, w_qkv, tb_qkv, wo_t, bo)

    return out_flat.reshape(B, S, D)


def reference(x, timestamps, params, n_heads):
    """Pure-JAX f32 reference matching the PyTorch module (eval mode, no dropout)."""
    B, S, D = x.shape
    hd = D // n_heads
    te = timestamps[..., None] * params["time_w"][:, 0] + params["time_b"]
    te = te * params["time_scale"][0]
    qk_in = x + te
    wq, wk, wv = jnp.split(params["in_w"], 3, axis=0)
    bq, bk, bv = jnp.split(params["in_b"], 3)
    q = qk_in @ wq.T + bq
    k = qk_in @ wk.T + bk
    v = x @ wv.T + bv                          # value = x (per the module's forward)
    q = q.reshape(B, S, n_heads, hd).transpose(0, 2, 1, 3)
    k = k.reshape(B, S, n_heads, hd).transpose(0, 2, 1, 3)
    v = v.reshape(B, S, n_heads, hd).transpose(0, 2, 1, 3)
    s = jnp.einsum("bhqd,bhkd->bhqk", q, k) / math.sqrt(hd)
    p = jax.nn.softmax(s, axis=-1)
    ctx = jnp.einsum("bhqk,bhkd->bhqd", p, v)
    ctx = ctx.transpose(0, 2, 1, 3).reshape(B, S, D)
    return ctx @ params["out_w"].T + params["out_b"]


def init_params(key, d_model):
    """Deterministic synthetic parameters matching the nn.Module shapes."""
    ks = jax.random.split(key, 6)
    scale = 0.1
    return {
        "time_w": jax.random.normal(ks[0], (d_model, 1), jnp.float32) * scale,          # Linear(1, D).weight
        "time_b": jax.random.normal(ks[1], (d_model,), jnp.float32) * scale,            # Linear(1, D).bias
        "in_w": jax.random.normal(ks[2], (3 * d_model, d_model), jnp.float32) * scale,  # MHA in_proj_weight
        "in_b": jax.random.normal(ks[3], (3 * d_model,), jnp.float32) * scale,          # MHA in_proj_bias
        "out_w": jax.random.normal(ks[4], (d_model, d_model), jnp.float32) * scale,     # MHA out_proj.weight
        "out_b": jax.random.normal(ks[5], (d_model,), jnp.float32) * scale,             # MHA out_proj.bias
        "time_scale": jnp.ones((1,), jnp.float32),                                      # nn.Parameter(torch.ones(1))
    }


if __name__ == "__main__":
    # Small config consistent with the module: batch=2, seq=8, d_model=32, n_heads=4
    B, S, D, H = 2, 8, 32, 4
    key = jax.random.PRNGKey(0)
    kx, kt, kp = jax.random.split(key, 3)

    x = jax.random.normal(kx, (B, S, D), jnp.float32)
    timestamps = jax.random.uniform(kt, (B, S), jnp.float32) * 10.0
    params = init_params(kp, D)

    out = temporal_attention(x, timestamps, params, n_heads=H)
    out = jax.block_until_ready(out)

    ref = reference(x, timestamps, params, n_heads=H)
    assert out.shape == (B, S, D)
    # bf16 MXU operands + approx reciprocal vs. the pure-f32 reference
    err = float(jnp.max(jnp.abs(out - ref)))
    assert jnp.allclose(out, ref, atol=5e-2, rtol=5e-2), err

    print("KERNEL_OK")
</pallas_src>

<mosaic_0001>
module attributes {stable_mosaic.version = 11 : i64} {
  func.func @_temporal_attn_kernel(%arg0: i32, %arg1: memref<8x32xf32, #tpu.memory_space<vmem>>, %arg2: memref<8x1xf32, #tpu.memory_space<vmem>>, %arg3: memref<32x96xbf16, #tpu.memory_space<vmem>>, %arg4: memref<2x96xf32, #tpu.memory_space<vmem>>, %arg5: memref<32x32xbf16, #tpu.memory_space<vmem>>, %arg6: memref<1x32xf32, #tpu.memory_space<vmem>>, %arg7: memref<8x32xf32, #tpu.memory_space<vmem>>) attributes {dimension_semantics = [#tpu.dimension_semantics<parallel>], iteration_bounds = array<i64: 2>, scalar_prefetch = 0 : i64, scratch_operands = 0 : i64, tpu.core_type = #tpu.core_type<tc>, window_params = [{transform_indices = @transform_0, window_bounds = array<i64: 8, 32>}, {transform_indices = @transform_1, window_bounds = array<i64: 8, 1>}, {pipeline_mode = #tpu.pipeline_mode<synchronous>, transform_indices = @transform_2, window_bounds = array<i64: 32, 96>}, {pipeline_mode = #tpu.pipeline_mode<synchronous>, transform_indices = @transform_3, window_bounds = array<i64: 2, 96>}, {pipeline_mode = #tpu.pipeline_mode<synchronous>, transform_indices = @transform_4, window_bounds = array<i64: 32, 32>}, {pipeline_mode = #tpu.pipeline_mode<synchronous>, transform_indices = @transform_5, window_bounds = array<i64: 1, 32>}, {transform_indices = @transform_6, window_bounds = array<i64: 8, 32>}]} {
    %c0 = arith.constant 0 : index
    %c0_0 = arith.constant 0 : index
    %0 = vector.load %arg1[%c0, %c0_0] : memref<8x32xf32, #tpu.memory_space<vmem>>, vector<8x32xf32>
    %c0_1 = arith.constant 0 : index
    %c0_2 = arith.constant 0 : index
    %1 = vector.load %arg2[%c0_1, %c0_2] : memref<8x1xf32, #tpu.memory_space<vmem>>, vector<8x1xf32>
    %c0_3 = arith.constant 0 : index
    %c0_4 = arith.constant 0 : index
    %2 = vector.load %arg4[%c0_3, %c0_4] : memref<2x96xf32, #tpu.memory_space<vmem>>, vector<2x96xf32>
    %3 = arith.truncf %0 : vector<8x32xf32> to vector<8x32xbf16>
    %c0_5 = arith.constant 0 : index
    %c0_6 = arith.constant 0 : index
    %4 = vector.load %arg3[%c0_5, %c0_6] : memref<32x96xbf16, #tpu.memory_space<vmem>>, vector<32x96xbf16>
    %cst = arith.constant dense<0.000000e+00> : vector<8x96xf32>
    %5 = tpu.matmul %3, %4, %cst {dimension_numbers = #tpu.dot_dimension_numbers<[1], [0], [0], [1], [0, 0, 1, 1], [], []>} : vector<8x32xbf16>, vector<32x96xbf16>, vector<8x96xf32> -> vector<8x96xf32>
    %6 = vector.extract_strided_slice %2 {offsets = [0, 0], sizes = [1, 96], strides = [1, 1]} : vector<2x96xf32> to vector<1x96xf32>
    %7 = vector.broadcast %1 : vector<8x1xf32> to vector<8x96xf32>
    %8 = vector.broadcast %6 : vector<1x96xf32> to vector<8x96xf32>
    %9 = arith.mulf %7, %8 : vector<8x96xf32>
    %10 = arith.addf %5, %9 : vector<8x96xf32>
    %11 = vector.extract_strided_slice %2 {offsets = [1, 0], sizes = [1, 96], strides = [1, 1]} : vector<2x96xf32> to vector<1x96xf32>
    %12 = vector.broadcast %11 : vector<1x96xf32> to vector<8x96xf32>
    %13 = arith.addf %10, %12 : vector<8x96xf32>
    %14 = vector.extract_strided_slice %13 {offsets = [0, 0], sizes = [8, 8], strides = [1, 1]} : vector<8x96xf32> to vector<8x8xf32>
    %15 = vector.extract_strided_slice %13 {offsets = [0, 32], sizes = [8, 8], strides = [1, 1]} : vector<8x96xf32> to vector<8x8xf32>
    %16 = vector.extract_strided_slice %13 {offsets = [0, 64], sizes = [8, 8], strides = [1, 1]} : vector<8x96xf32> to vector<8x8xf32>
    %17 = vector.shape_cast %14 : vector<8x8xf32> to vector<1x8x8xf32>
    %18 = arith.truncf %17 : vector<1x8x8xf32> to vector<1x8x8xbf16>
    %19 = vector.shape_cast %15 : vector<8x8xf32> to vector<1x8x8xf32>
    %20 = arith.truncf %19 : vector<1x8x8xf32> to vector<1x8x8xbf16>
    %21 = vector.shape_cast %16 : vector<8x8xf32> to vector<1x8x8xf32>
    %22 = arith.truncf %21 : vector<1x8x8xf32> to vector<1x8x8xbf16>
    "tpu.trace_start"() <{level = 10 : i32, message = "bqd,bkd->bqk"}> : () -> ()
    %cst_7 = arith.constant dense<0.000000e+00> : vector<1x8x8xf32>
    %23 = tpu.matmul %18, %20, %cst_7 {dimension_numbers = #tpu.dot_dimension_numbers<[2], [2], [1], [1], [0, 0, 0, 1, 1, 1], [0], [0]>} : vector<1x8x8xbf16>, vector<1x8x8xbf16>, vector<1x8x8xf32> -> vector<1x8x8xf32>
    "tpu.trace_stop"() : () -> ()
    %cst_8 = arith.constant 0.353553385 : f32
    %24 = vector.broadcast %cst_8 : f32 to vector<1x8x8xf32>
    %25 = arith.mulf %23, %24 : vector<1x8x8xf32>
    %cst_9 = arith.constant dense<0xFF800000> : vector<1x8xf32>
    %26 = vector.multi_reduction <maximumf>, %25, %cst_9 [2] : vector<1x8x8xf32> to vector<1x8xf32>
    %27 = vector.shape_cast %26 : vector<1x8xf32> to vector<1x8x1xf32>
    %28 = vector.broadcast %27 : vector<1x8x1xf32> to vector<1x8x8xf32>
    %29 = arith.subf %25, %28 : vector<1x8x8xf32>
    %30 = math.exp %29 : vector<1x8x8xf32>
    %cst_10 = arith.constant dense<0.000000e+00> : vector<1x8xf32>
    %31 = vector.multi_reduction <add>, %30, %cst_10 [2] : vector<1x8x8xf32> to vector<1x8xf32>
    %32 = vector.shape_cast %31 : vector<1x8xf32> to vector<1x8x1xf32>
    %33 = tpu.reciprocal %32 {approx = true} : vector<1x8x1xf32> -> vector<1x8x1xf32>
    %34 = vector.broadcast %33 : vector<1x8x1xf32> to vector<1x8x8xf32>
    %35 = arith.mulf %30, %34 : vector<1x8x8xf32>
    %36 = arith.truncf %35 : vector<1x8x8xf32> to vector<1x8x8xbf16>
    "tpu.trace_start"() <{level = 10 : i32, message = "bqk,bkd->bqd"}> : () -> ()
    %cst_11 = arith.constant dense<0.000000e+00> : vector<1x8x8xf32>
    %37 = tpu.matmul %36, %22, %cst_11 {dimension_numbers = #tpu.dot_dimension_numbers<[2], [1], [1], [2], [0, 0, 0, 1, 1, 2], [0], [0]>} : vector<1x8x8xbf16>, vector<1x8x8xbf16>, vector<1x8x8xf32> -> vector<1x8x8xf32>
    "tpu.trace_stop"() : () -> ()
    %38 = vector.shape_cast %37 : vector<1x8x8xf32> to vector<8x8xf32>
    %39 = arith.truncf %38 : vector<8x8xf32> to vector<8x8xbf16>
    %c0_12 = arith.constant 0 : index
    %c0_13 = arith.constant 0 : index
    %40 = vector.load %arg5[%c0_12, %c0_13] : memref<32x32xbf16, #tpu.memory_space<vmem>>, vector<8x32xbf16>
    %cst_14 = arith.constant dense<0.000000e+00> : vector<8x32xf32>
    %41 = tpu.matmul %39, %40, %cst_14 {dimension_numbers = #tpu.dot_dimension_numbers<[1], [0], [0], [1], [0, 0, 1, 1], [], []>} : vector<8x8xbf16>, vector<8x32xbf16>, vector<8x32xf32> -> vector<8x32xf32>
    %42 = vector.extract_strided_slice %13 {offsets = [0, 8], sizes = [8, 8], strides = [1, 1]} : vector<8x96xf32> to vector<8x8xf32>
    %43 = vector.extract_strided_slice %13 {offsets = [0, 40], sizes = [8, 8], strides = [1, 1]} : vector<8x96xf32> to vector<8x8xf32>
    %44 = vector.extract_strided_slice %13 {offsets = [0, 72], sizes = [8, 8], strides = [1, 1]} : vector<8x96xf32> to vector<8x8xf32>
    %45 = vector.shape_cast %42 : vector<8x8xf32> to vector<1x8x8xf32>
    %46 = arith.truncf %45 : vector<1x8x8xf32> to vector<1x8x8xbf16>
    %47 = vector.shape_cast %43 : vector<8x8xf32> to vector<1x8x8xf32>
    %48 = arith.truncf %47 : vector<1x8x8xf32> to vector<1x8x8xbf16>
    %49 = vector.shape_cast %44 : vector<8x8xf32> to vector<1x8x8xf32>
    %50 = arith.truncf %49 : vector<1x8x8xf32> to vector<1x8x8xbf16>
    "tpu.trace_start"() <{level = 10 : i32, message = "bqd,bkd->bqk"}> : () -> ()
    %cst_15 = arith.constant dense<0.000000e+00> : vector<1x8x8xf32>
    %51 = tpu.matmul %46, %48, %cst_15 {dimension_numbers = #tpu.dot_dimension_numbers<[2], [2], [1], [1], [0, 0, 0, 1, 1, 1], [0], [0]>} : vector<1x8x8xbf16>, vector<1x8x8xbf16>, vector<1x8x8xf32> -> vector<1x8x8xf32>
    "tpu.trace_stop"() : () -> ()
    %cst_16 = arith.constant 0.353553385 : f32
    %52 = vector.broadcast %cst_16 : f32 to vector<1x8x8xf32>
    %53 = arith.mulf %51, %52 : vector<1x8x8xf32>
    %cst_17 = arith.constant dense<0xFF800000> : vector<1x8xf32>
    %54 = vector.multi_reduction <maximumf>, %53, %cst_17 [2] : vector<1x8x8xf32> to vector<1x8xf32>
    %55 = vector.shape_cast %54 : vector<1x8xf32> to vector<1x8x1xf32>
    %56 = vector.broadcast %55 : vector<1x8x1xf32> to vector<1x8x8xf32>
    %57 = arith.subf %53, %56 : vector<1x8x8xf32>
    %58 = math.exp %57 : vector<1x8x8xf32>
    %cst_18 = arith.constant dense<0.000000e+00> : vector<1x8xf32>
    %59 = vector.multi_reduction <add>, %58, %cst_18 [2] : vector<1x8x8xf32> to vector<1x8xf32>
    %60 = vector.shape_cast %59 : vector<1x8xf32> to vector<1x8x1xf32>
    %61 = tpu.reciprocal %60 {approx = true} : vector<1x8x1xf32> -> vector<1x8x1xf32>
    %62 = vector.broadcast %61 : vector<1x8x1xf32> to vector<1x8x8xf32>
    %63 = arith.mulf %58, %62 : vector<1x8x8xf32>
    %64 = arith.truncf %63 : vector<1x8x8xf32> to vector<1x8x8xbf16>
    "tpu.trace_start"() <{level = 10 : i32, message = "bqk,bkd->bqd"}> : () -> ()
    %cst_19 = arith.constant dense<0.000000e+00> : vector<1x8x8xf32>
    %65 = tpu.matmul %64, %50, %cst_19 {dimension_numbers = #tpu.dot_dimension_numbers<[2], [1], [1], [2], [0, 0, 0, 1, 1, 2], [0], [0]>} : vector<1x8x8xbf16>, vector<1x8x8xbf16>, vector<1x8x8xf32> -> vector<1x8x8xf32>
    "tpu.trace_stop"() : () -> ()
    %66 = vector.shape_cast %65 : vector<1x8x8xf32> to vector<8x8xf32>
    %67 = arith.truncf %66 : vector<8x8xf32> to vector<8x8xbf16>
    %c8 = arith.constant 8 : index
    %c0_20 = arith.constant 0 : index
    %68 = vector.load %arg5[%c8, %c0_20] : memref<32x32xbf16, #tpu.memory_space<vmem>>, vector<8x32xbf16>
    %cst_21 = arith.constant dense<0.000000e+00> : vector<8x32xf32>
    %69 = tpu.matmul %67, %68, %cst_21 {dimension_numbers = #tpu.dot_dimension_numbers<[1], [0], [0], [1], [0, 0, 1, 1], [], []>} : vector<8x8xbf16>, vector<8x32xbf16>, vector<8x32xf32> -> vector<8x32xf32>
    %70 = arith.addf %41, %69 : vector<8x32xf32>
    %71 = vector.extract_strided_slice %13 {offsets = [0, 16], sizes = [8, 8], strides = [1, 1]} : vector<8x96xf32> to vector<8x8xf32>
    %72 = vector.extract_strided_slice %13 {offsets = [0, 48], sizes = [8, 8], strides = [1, 1]} : vector<8x96xf32> to vector<8x8xf32>
    %73 = vector.extract_strided_slice %13 {offsets = [0, 80], sizes = [8, 8], strides = [1, 1]} : vector<8x96xf32> to vector<8x8xf32>
    %74 = vector.shape_cast %71 : vector<8x8xf32> to vector<1x8x8xf32>
    %75 = arith.truncf %74 : vector<1x8x8xf32> to vector<1x8x8xbf16>
    %76 = vector.shape_cast %72 : vector<8x8xf32> to vector<1x8x8xf32>
    %77 = arith.truncf %76 : vector<1x8x8xf32> to vector<1x8x8xbf16>
    %78 = vector.shape_cast %73 : vector<8x8xf32> to vector<1x8x8xf32>
    %79 = arith.truncf %78 : vector<1x8x8xf32> to vector<1x8x8xbf16>
    "tpu.trace_start"() <{level = 10 : i32, message = "bqd,bkd->bqk"}> : () -> ()
    %cst_22 = arith.constant dense<0.000000e+00> : vector<1x8x8xf32>
    %80 = tpu.matmul %75, %77, %cst_22 {dimension_numbers = #tpu.dot_dimension_numbers<[2], [2], [1], [1], [0, 0, 0, 1, 1, 1], [0], [0]>} : vector<1x8x8xbf16>, vector<1x8x8xbf16>, vector<1x8x8xf32> -> vector<1x8x8xf32>
    "tpu.trace_stop"() : () -> ()
    %cst_23 = arith.constant 0.353553385 : f32
    %81 = vector.broadcast %cst_23 : f32 to vector<1x8x8xf32>
    %82 = arith.mulf %80, %81 : vector<1x8x8xf32>
    %cst_24 = arith.constant dense<0xFF800000> : vector<1x8xf32>
    %83 = vector.multi_reduction <maximumf>, %82, %cst_24 [2] : vector<1x8x8xf32> to vector<1x8xf32>
    %84 = vector.shape_cast %83 : vector<1x8xf32> to vector<1x8x1xf32>
    %85 = vector.broadcast %84 : vector<1x8x1xf32> to vector<1x8x8xf32>
    %86 = arith.subf %82, %85 : vector<1x8x8xf32>
    %87 = math.exp %86 : vector<1x8x8xf32>
    %cst_25 = arith.constant dense<0.000000e+00> : vector<1x8xf32>
    %88 = vector.multi_reduction <add>, %87, %cst_25 [2] : vector<1x8x8xf32> to vector<1x8xf32>
    %89 = vector.shape_cast %88 : vector<1x8xf32> to vector<1x8x1xf32>
    %90 = tpu.reciprocal %89 {approx = true} : vector<1x8x1xf32> -> vector<1x8x1xf32>
    %91 = vector.broadcast %90 : vector<1x8x1xf32> to vector<1x8x8xf32>
    %92 = arith.mulf %87, %91 : vector<1x8x8xf32>
    %93 = arith.truncf %92 : vector<1x8x8xf32> to vector<1x8x8xbf16>
    "tpu.trace_start"() <{level = 10 : i32, message = "bqk,bkd->bqd"}> : () -> ()
    %cst_26 = arith.constant dense<0.000000e+00> : vector<1x8x8xf32>
    %94 = tpu.matmul %93, %79, %cst_26 {dimension_numbers = #tpu.dot_dimension_numbers<[2], [1], [1], [2], [0, 0, 0, 1, 1, 2], [0], [0]>} : vector<1x8x8xbf16>, vector<1x8x8xbf16>, vector<1x8x8xf32> -> vector<1x8x8xf32>
    "tpu.trace_stop"() : () -> ()
    %95 = vector.shape_cast %94 : vector<1x8x8xf32> to vector<8x8xf32>
    %96 = arith.truncf %95 : vector<8x8xf32> to vector<8x8xbf16>
    %c16 = arith.constant 16 : index
    %c0_27 = arith.constant 0 : index
    %97 = vector.load %arg5[%c16, %c0_27] : memref<32x32xbf16, #tpu.memory_space<vmem>>, vector<8x32xbf16>
    %cst_28 = arith.constant dense<0.000000e+00> : vector<8x32xf32>
    %98 = tpu.matmul %96, %97, %cst_28 {dimension_numbers = #tpu.dot_dimension_numbers<[1], [0], [0], [1], [0, 0, 1, 1], [], []>} : vector<8x8xbf16>, vector<8x32xbf16>, vector<8x32xf32> -> vector<8x32xf32>
    %99 = arith.addf %70, %98 : vector<8x32xf32>
    %100 = vector.extract_strided_slice %13 {offsets = [0, 24], sizes = [8, 8], strides = [1, 1]} : vector<8x96xf32> to vector<8x8xf32>
    %101 = vector.extract_strided_slice %13 {offsets = [0, 56], sizes = [8, 8], strides = [1, 1]} : vector<8x96xf32> to vector<8x8xf32>
    %102 = vector.extract_strided_slice %13 {offsets = [0, 88], sizes = [8, 8], strides = [1, 1]} : vector<8x96xf32> to vector<8x8xf32>
    %103 = vector.shape_cast %100 : vector<8x8xf32> to vector<1x8x8xf32>
    %104 = arith.truncf %103 : vector<1x8x8xf32> to vector<1x8x8xbf16>
    %105 = vector.shape_cast %101 : vector<8x8xf32> to vector<1x8x8xf32>
    %106 = arith.truncf %105 : vector<1x8x8xf32> to vector<1x8x8xbf16>
    %107 = vector.shape_cast %102 : vector<8x8xf32> to vector<1x8x8xf32>
    %108 = arith.truncf %107 : vector<1x8x8xf32> to vector<1x8x8xbf16>
    "tpu.trace_start"() <{level = 10 : i32, message = "bqd,bkd->bqk"}> : () -> ()
    %cst_29 = arith.constant dense<0.000000e+00> : vector<1x8x8xf32>
    %109 = tpu.matmul %104, %106, %cst_29 {dimension_numbers = #tpu.dot_dimension_numbers<[2], [2], [1], [1], [0, 0, 0, 1, 1, 1], [0], [0]>} : vector<1x8x8xbf16>, vector<1x8x8xbf16>, vector<1x8x8xf32> -> vector<1x8x8xf32>
    "tpu.trace_stop"() : () -> ()
    %cst_30 = arith.constant 0.353553385 : f32
    %110 = vector.broadcast %cst_30 : f32 to vector<1x8x8xf32>
    %111 = arith.mulf %109, %110 : vector<1x8x8xf32>
    %cst_31 = arith.constant dense<0xFF800000> : vector<1x8xf32>
    %112 = vector.multi_reduction <maximumf>, %111, %cst_31 [2] : vector<1x8x8xf32> to vector<1x8xf32>
    %113 = vector.shape_cast %112 : vector<1x8xf32> to vector<1x8x1xf32>
    %114 = vector.broadcast %113 : vector<1x8x1xf32> to vector<1x8x8xf32>
    %115 = arith.subf %111, %114 : vector<1x8x8xf32>
    %116 = math.exp %115 : vector<1x8x8xf32>
    %cst_32 = arith.constant dense<0.000000e+00> : vector<1x8xf32>
    %117 = vector.multi_reduction <add>, %116, %cst_32 [2] : vector<1x8x8xf32> to vector<1x8xf32>
    %118 = vector.shape_cast %117 : vector<1x8xf32> to vector<1x8x1xf32>
    %119 = tpu.reciprocal %118 {approx = true} : vector<1x8x1xf32> -> vector<1x8x1xf32>
    %120 = vector.broadcast %119 : vector<1x8x1xf32> to vector<1x8x8xf32>
    %121 = arith.mulf %116, %120 : vector<1x8x8xf32>
    %122 = arith.truncf %121 : vector<1x8x8xf32> to vector<1x8x8xbf16>
    "tpu.trace_start"() <{level = 10 : i32, message = "bqk,bkd->bqd"}> : () -> ()
    %cst_33 = arith.constant dense<0.000000e+00> : vector<1x8x8xf32>
    %123 = tpu.matmul %122, %108, %cst_33 {dimension_numbers = #tpu.dot_dimension_numbers<[2], [1], [1], [2], [0, 0, 0, 1, 1, 2], [0], [0]>} : vector<1x8x8xbf16>, vector<1x8x8xbf16>, vector<1x8x8xf32> -> vector<1x8x8xf32>
    "tpu.trace_stop"() : () -> ()
    %124 = vector.shape_cast %123 : vector<1x8x8xf32> to vector<8x8xf32>
    %125 = arith.truncf %124 : vector<8x8xf32> to vector<8x8xbf16>
    %c24 = arith.constant 24 : index
    %c0_34 = arith.constant 0 : index
    %126 = vector.load %arg5[%c24, %c0_34] : memref<32x32xbf16, #tpu.memory_space<vmem>>, vector<8x32xbf16>
    %cst_35 = arith.constant dense<0.000000e+00> : vector<8x32xf32>
    %127 = tpu.matmul %125, %126, %cst_35 {dimension_numbers = #tpu.dot_dimension_numbers<[1], [0], [0], [1], [0, 0, 1, 1], [], []>} : vector<8x8xbf16>, vector<8x32xbf16>, vector<8x32xf32> -> vector<8x32xf32>
    %128 = arith.addf %99, %127 : vector<8x32xf32>
    %c0_36 = arith.constant 0 : index
    %c0_37 = arith.constant 0 : index
    %129 = vector.load %arg6[%c0_36, %c0_37] : memref<1x32xf32, #tpu.memory_space<vmem>>, vector<1x32xf32>
    %130 = vector.broadcast %129 : vector<1x32xf32> to vector<8x32xf32>
    %131 = arith.addf %128, %130 : vector<8x32xf32>
    %c0_38 = arith.constant 0 : index
    %c0_39 = arith.constant 0 : index
    %132 = vector.load %arg7[%c0_38, %c0_39] : memref<8x32xf32, #tpu.memory_space<vmem>>, vector<8x32xf32>
    tpu.vector_store %arg7[%c0_38, %c0_39], %131 {strides = array<i32>} : memref<8x32xf32, #tpu.memory_space<vmem>>, vector<8x32xf32>,
    return
  }
  func.func @transform_0(%arg0: i32) -> (i32, i32) {
    %c0_i32 = arith.constant 0 : i32
    %c0_i32_0 = arith.constant 0 : i32
    return %arg0, %c0_i32 : i32, i32
  }
  func.func @transform_1(%arg0: i32) -> (i32, i32) {
    %c0_i32 = arith.constant 0 : i32
    %c0_i32_0 = arith.constant 0 : i32
    return %arg0, %c0_i32 : i32, i32
  }
  func.func @transform_2(%arg0: i32) -> (i32, i32) {
    %c0_i32 = arith.constant 0 : i32
    %c0_i32_0 = arith.constant 0 : i32
    %c0_i32_1 = arith.constant 0 : i32
    return %c0_i32, %c0_i32_0 : i32, i32
  }
  func.func @transform_3(%arg0: i32) -> (i32, i32) {
    %c0_i32 = arith.constant 0 : i32
    %c0_i32_0 = arith.constant 0 : i32
    %c0_i32_1 = arith.constant 0 : i32
    return %c0_i32, %c0_i32_0 : i32, i32
  }
  func.func @transform_4(%arg0: i32) -> (i32, i32) {
    %c0_i32 = arith.constant 0 : i32
    %c0_i32_0 = arith.constant 0 : i32
    %c0_i32_1 = arith.constant 0 : i32
    return %c0_i32, %c0_i32_0 : i32, i32
  }
  func.func @transform_5(%arg0: i32) -> (i32, i32) {
    %c0_i32 = arith.constant 0 : i32
    %c0_i32_0 = arith.constant 0 : i32
    %c0_i32_1 = arith.constant 0 : i32
    return %c0_i32, %c0_i32_0 : i32, i32
  }
  func.func @transform_6(%arg0: i32) -> (i32, i32) {
    %c0_i32 = arith.constant 0 : i32
    %c0_i32_0 = arith.constant 0 : i32
    return %arg0, %c0_i32 : i32, i32
  }
}

</mosaic_0001>

<llo_original>
// kernel: tpu_custom_call.1
$region0: #{tpu_custom_call.1}
  #allocation0 [shape = 'u32[]', space=smem, size = 0x4, offset = 0x4, fixed_abs, tag = 'smem constant byte address 0x4 - core index']
  #allocation1 [shape = 'u32[144,128]{1,0:T(1,128)}', space=vmem, size = 0x12000, scoped, tag = 'internal scratch']
  %s0 = inlined_call_operand.vmem [shape: f32[16,32], index: 0, kind: input, shape index: {}]
  %s1 = inlined_call_operand.vmem [shape: f32[16,1], index: 1, kind: input, shape index: {}]
  %s2 = inlined_call_operand.hbm [shape: bf16[32,96], index: 2, kind: input, shape index: {}]
  %s3 = inlined_call_operand.hbm [shape: f32[2,96], index: 3, kind: input, shape index: {}]
  %s4 = inlined_call_operand.vmem [shape: bf16[32,32], index: 4, kind: input, shape index: {}]
  %s5 = inlined_call_operand.vmem [shape: f32[1,32], index: 5, kind: input, shape index: {}]
  %s6 = inlined_call_operand.hbm [shape: f32[16,32], index: 6, kind: output, shape index: {}]
  %s7 = sld [smem:[#allocation0]]
  $region65: #{tpu_custom_call.1} parent=0
    _
  %s9 = ssub.s32 1, %s7
  %s10 = scalar_select 0, %s9, %s7
  $region1: #{tpu_custom_call.1} parent=0
    #allocation2 [shape = 'u8[8192]{0}', space=vmem, size = 0x2000, scoped, tag = 'input window, operand 2, single buffered']
    #allocation3 [shape = 's32[2]{0}', space=sflag, size = 0x8, scoped, tag = 'scoped memory for tpu_custom_call.1']
    #allocation4 [shape = 's32[2]{0}', space=sflag, size = 0x8, scoped, tag = 'scoped memory for tpu_custom_call.1']
    #allocation5 [shape = 'u8[1024]{0}', space=vmem, size = 0x400, scoped, tag = 'input window, operand 3, single buffered']
    #allocation6 [shape = 's32[1]{0}', space=sflag, size = 0x4, scoped, tag = 'scoped memory for tpu_custom_call.1']
    #allocation7 [shape = 'u8[8192]{0}', space=vmem, size = 0x2000, scoped, tag = 'output window, operand 0']
    %11 = vsyncpa [#allocation3], 0
    %12 = vsyncpa [#allocation6], 0
    %13 = vsyncpa [#allocation4], 0
    %s14 = scalar_lea.sflag [#allocation4], 1
    %15 = vsyncpa %s14, 0
    loop: start=0, step=1, limit=4
    $region2: #{tpu_custom_call.1} parent=1 // loop_pre_header
      _
    $region3: #{tpu_custom_call.1} parent=1 // loop_header
      %s17 = sphi 0, %s21
      %p18 = scmp.ge.s32.totalorder %s17, 4
      %s27 = sphi 0, %s29
      %s30 = sphi 0, %s27
      %s31 = sphi 0, %s30
      %s47 = sphi 0, %s31
      %s53 = sphi 0, %s55
      %s56 = sphi 0, %s53
      %s57 = sphi 0, %s56
      %s73 = sphi 0, %s57
      %s77 = sphi 0, %s77
      %s79 = sphi 0, %s77
      %s80 = sphi 0, %s79
      %s94 = sphi 0, %s80
      %s98 = sphi 0, %s98
      %s100 = sphi 0, %s98
      %s101 = sphi 0, %s100
      %s115 = sphi 0, %s101
      %s119 = sphi 0, %s119
      %s121 = sphi 0, %s119
      %s122 = sphi 0, %s121
      %s136 = sphi 0, %s122
      %s140 = sphi 0, %s140
      %s142 = sphi 0, %s140
      %s143 = sphi 0, %s142
      %s157 = sphi 0, %s143
      %s163 = sphi 0, %s165
      %s166 = sphi 0, %s163
      %s167 = sphi 0, %s166
      %s183 = sphi 0, %s167
    $region4: #{tpu_custom_call.1} parent=1 // loop_header_branch
      %20 = sbr.rel (%p18) target = $region8
    $region5: #{tpu_custom_call.1} parent=1 // loop_body
      %s22 = ssub.s32 %s17, 1
      %s23 = ssub.s32 %s17, 2
      %s24 = sadd.s32 %s17, 1
      %s25 = ssub.s32 %s17, %s24
      %p26 = scmp.eq.s32.totalorder %s25, 0
      %s28 = sadd.s32 %s27, 1
      %s29 = scalar_select %p26, %s27, %s28
      %p32 = pneg %p26
      %p33 = scmp.eq.s32.totalorder %s17, 1
      %p34 = por %p32, %p33
      %p35 = scmp.ne.s32.totalorder %s27, %s30
      %p36 = scmp.eq.s32.totalorder %s17, 0
      %p37 = por %p35, %p36
      %p38 = scmp.ne.s32.totalorder %s27, %s30
      %p39 = scmp.eq.s32.totalorder %s22, 1
      %p40 = por %p38, %p39
      %p41 = scmp.ne.s32.totalorder %s30, %s31
      %p42 = scmp.eq.s32.totalorder %s22, 0
      %p43 = por %p41, %p42
      %p44 = scmp.ne.s32.totalorder %s30, %s31
      %p45 = scmp.eq.s32.totalorder %s23, 1
      %p46 = por %p44, %p45
      %p48 = scmp.ne.s32.totalorder %s31, %s47
      %p49 = scmp.eq.s32.totalorder %s23, 0
      %p50 = por %p48, %p49
      %s51 = ssub.s32 %s17, %s24
      %p52 = scmp.eq.s32.totalorder %s51, 0
      %s54 = sadd.s32 %s53, 1
      %s55 = scalar_select %p52, %s53, %s54
      %p58 = pneg %p52
      %p59 = scmp.eq.s32.totalorder %s17, 1
      %p60 = por %p58, %p59
      %p61 = scmp.ne.s32.totalorder %s53, %s56
      %p62 = scmp.eq.s32.totalorder %s17, 0
      %p63 = por %p61, %p62
      %p64 = scmp.ne.s32.totalorder %s53, %s56
      %p65 = scmp.eq.s32.totalorder %s22, 1
      %p66 = por %p64, %p65
      %p67 = scmp.ne.s32.totalorder %s56, %s57
      %p68 = scmp.eq.s32.totalorder %s22, 0
      %p69 = por %p67, %p68
      %p70 = scmp.ne.s32.totalorder %s56, %s57
      %p71 = scmp.eq.s32.totalorder %s23, 1
      %p72 = por %p70, %p71
      %p74 = scmp.ne.s32.totalorder %s57, %s73
      %p75 = scmp.eq.s32.totalorder %s23, 0
      %p76 = por %p74, %p75
      %s78 = sadd.s32 %s77, 1
      %p81 = scmp.eq.s32.totalorder %s17, 1
      %p82 = scmp.ne.s32.totalorder %s77, %s79
      %p83 = scmp.eq.s32.totalorder %s17, 0
      %p84 = por %p82, %p83
      %p85 = scmp.ne.s32.totalorder %s77, %s79
      %p86 = scmp.eq.s32.totalorder %s22, 1
      %p87 = por %p85, %p86
      %p88 = scmp.ne.s32.totalorder %s79, %s80
      %p89 = scmp.eq.s32.totalorder %s22, 0
      %p90 = por %p88, %p89
      %p91 = scmp.ne.s32.totalorder %s79, %s80
      %p92 = scmp.eq.s32.totalorder %s23, 1
      %p93 = por %p91, %p92
      %p95 = scmp.ne.s32.totalorder %s80, %s94
      %p96 = scmp.eq.s32.totalorder %s23, 0
      %p97 = por %p95, %p96
      %s99 = sadd.s32 %s98, 1
      %p102 = scmp.eq.s32.totalorder %s17, 1
      %p103 = scmp.ne.s32.totalorder %s98, %s100
      %p104 = scmp.eq.s32.totalorder %s17, 0
      %p105 = por %p103, %p104
      %p106 = scmp.ne.s32.totalorder %s98, %s100
      %p107 = scmp.eq.s32.totalorder %s22, 1
      %p108 = por %p106, %p107
      %p109 = scmp.ne.s32.totalorder %s100, %s101
      %p110 = scmp.eq.s32.totalorder %s22, 0
      %p111 = por %p109, %p110
      %p112 = scmp.ne.s32.totalorder %s100, %s101
      %p113 = scmp.eq.s32.totalorder %s23, 1
      %p114 = por %p112, %p113
      %p116 = scmp.ne.s32.totalorder %s101, %s115
      %p117 = scmp.eq.s32.totalorder %s23, 0
      %p118 = por %p116, %p117
      %s120 = sadd.s32 %s119, 1
      %p123 = scmp.eq.s32.totalorder %s17, 1
      %p124 = scmp.ne.s32.totalorder %s119, %s121
      %p125 = scmp.eq.s32.totalorder %s17, 0
      %p126 = por %p124, %p125
      %p127 = scmp.ne.s32.totalorder %s119, %s121
      %p128 = scmp.eq.s32.totalorder %s22, 1
      %p129 = por %p127, %p128
      %p130 = scmp.ne.s32.totalorder %s121, %s122
      %p131 = scmp.eq.s32.totalorder %s22, 0
      %p132 = por %p130, %p131
      %p133 = scmp.ne.s32.totalorder %s121, %s122
      %p134 = scmp.eq.s32.totalorder %s23, 1
      %p135 = por %p133, %p134
      %p137 = scmp.ne.s32.totalorder %s122, %s136
      %p138 = scmp.eq.s32.totalorder %s23, 0
      %p139 = por %p137, %p138
      %s141 = sadd.s32 %s140, 1
      %p144 = scmp.eq.s32.totalorder %s17, 1
      %p145 = scmp.ne.s32.totalorder %s140, %s142
      %p146 = scmp.eq.s32.totalorder %s17, 0
      %p147 = por %p145, %p146
      %p148 = scmp.ne.s32.totalorder %s140, %s142
      %p149 = scmp.eq.s32.totalorder %s22, 1
      %p150 = por %p148, %p149
      %p151 = scmp.ne.s32.totalorder %s142, %s143
      %p152 = scmp.eq.s32.totalorder %s22, 0
      %p153 = por %p151, %p152
      %p154 = scmp.ne.s32.totalorder %s142, %s143
      %p155 = scmp.eq.s32.totalorder %s23, 1
      %p156 = por %p154, %p155
      %p158 = scmp.ne.s32.totalorder %s143, %s157
      %p159 = scmp.eq.s32.totalorder %s23, 0
      %p160 = por %p158, %p159
      %s161 = ssub.s32 %s17, %s24
      %p162 = scmp.eq.s32.totalorder %s161, 0
      %s164 = sadd.s32 %s163, 1
      %s165 = scalar_select %p162, %s163, %s164
      %p168 = pneg %p162
      %p169 = scmp.eq.s32.totalorder %s17, 1
      %p170 = por %p168, %p169
      %p171 = scmp.ne.s32.totalorder %s163, %s166
      %p172 = scmp.eq.s32.totalorder %s17, 0
      %p173 = por %p171, %p172
      %p174 = scmp.ne.s32.totalorder %s163, %s166
      %p175 = scmp.eq.s32.totalorder %s22, 1
      %p176 = por %p174, %p175
      %p177 = scmp.ne.s32.totalorder %s166, %s167
      %p178 = scmp.eq.s32.totalorder %s22, 0
      %p179 = por %p177, %p178
      %p180 = scmp.ne.s32.totalorder %s166, %s167
      %p181 = scmp.eq.s32.totalorder %s23, 1
      %p182 = por %p180, %p181
      %p184 = scmp.ne.s32.totalorder %s167, %s183
      %p185 = scmp.eq.s32.totalorder %s23, 0
      %p186 = por %p184, %p185
      %p187 = scmp.le.s32.totalorder 1, %s17
      %p188 = scmp.lt.s32.totalorder %s17, 3
      %p189 = pnand %p187, %p188
      %p190 = pneg %p189
      // Predicated region
      $region9: #{tpu_custom_call.1} parent=5 // pred_check
        _
      $region10: #{tpu_custom_call.1} parent=5 // pred_check_branch
        %192 = sbr.rel (%p189) target = $region12
      $region11: #{tpu_custom_call.1} parent=5 // pred_region
        %s193 = ssub.s32 %s17, 1
        // Predicated region
        $region13: #{tpu_custom_call.1} parent=11 // pred_check
          %p194 = pneg %p90
        $region14: #{tpu_custom_call.1} parent=11 // pred_check_branch
          %196 = sbr.rel (%p194) target = $region16
        $region15: #{tpu_custom_call.1} parent=11 // pred_region
          %s198 = ssub.s32 256, 256
          %199 = vsyncadd [#allocation3], %s198
          %s200 = sshll.u32 [#allocation2], 4
          %s201 = int_to_ptr.vmem [resolvable:$true] %s200
          %206 = dma.hbm_to_vmem [thread:$0]  %s2, 256, %s201, [#allocation3], 64, 64, 4
        $region16: #{tpu_custom_call.1} parent=11 // pred_fallthru
          _
        // Predicated region
        $region17: #{tpu_custom_call.1} parent=11 // pred_check
          %p207 = pneg %p111
        $region18: #{tpu_custom_call.1} parent=11 // pred_check_branch
          %209 = sbr.rel (%p207) target = $region20
        $region19: #{tpu_custom_call.1} parent=11 // pred_region
          %s211 = ssub.s32 32, 32
          %212 = vsyncadd [#allocation6], %s211
          %s214 = sshll.u32 [#allocation5], 4
          %s215 = int_to_ptr.vmem [resolvable:$true] %s214
          %217 = dma.hbm_to_vmem [thread:$0]  %s3, 32, %s215, [#allocation6]
        $region20: #{tpu_custom_call.1} parent=11 // pred_fallthru
          _
        // Predicated region
        $region21: #{tpu_custom_call.1} parent=11 // pred_check
          %p218 = pneg %p132
        $region22: #{tpu_custom_call.1} parent=11 // pred_check_branch
          %220 = sbr.rel (%p218) target = $region24
        $region23: #{tpu_custom_call.1} parent=11 // pred_region
          _
        $region24: #{tpu_custom_call.1} parent=11 // pred_fallthru
          _
        // Predicated region
        $region25: #{tpu_custom_call.1} parent=11 // pred_check
          %p221 = pneg %p153
        $region26: #{tpu_custom_call.1} parent=11 // pred_check_branch
          %223 = sbr.rel (%p221) target = $region28
        $region27: #{tpu_custom_call.1} parent=11 // pred_region
          _
        $region28: #{tpu_custom_call.1} parent=11 // pred_fallthru
          _
      $region12: #{tpu_custom_call.1} parent=5 // pred_fallthru
        _
      %p224 = scmp.lt.s32.totalorder %s17, 2
      // Predicated region
      $region29: #{tpu_custom_call.1} parent=5 // pred_check
        %p225 = pneg %p224
      $region30: #{tpu_custom_call.1} parent=5 // pred_check_branch
        %227 = sbr.rel (%p225) target = $region32
      $region31: #{tpu_custom_call.1} parent=5 // pred_region
        // Predicated region
        $region33: #{tpu_custom_call.1} parent=31 // pred_check
          %p228 = pneg %p37
        $region34: #{tpu_custom_call.1} parent=31 // pred_check_branch
          %230 = sbr.rel (%p228) target = $region36
        $region35: #{tpu_custom_call.1} parent=31 // pred_region
          %p231 = scmp.lt.s32.totalorder %s17, 1
          %s232 = scalar_select %p231, %s17, 1
          %s233 = smul.addr %s232, 8
          %s234 = scalar_lea.vmem %s0, %s233
        $region36: #{tpu_custom_call.1} parent=31 // pred_fallthru
          _
        // Predicated region
        $region37: #{tpu_custom_call.1} parent=31 // pred_check
          %p235 = pneg %p63
        $region38: #{tpu_custom_call.1} parent=31 // pred_check_branch
          %237 = sbr.rel (%p235) target = $region40
        $region39: #{tpu_custom_call.1} parent=31 // pred_region
          %p238 = scmp.lt.s32.totalorder %s17, 1
          %s239 = scalar_select %p238, %s17, 1
          %s240 = smul.addr %s239, 8
          %s241 = scalar_lea.vmem %s1, %s240
        $region40: #{tpu_custom_call.1} parent=31 // pred_fallthru
          _
      $region32: #{tpu_custom_call.1} parent=5 // pred_fallthru
        _
      %p242 = scmp.le.s32.totalorder 1, %s17
      %p243 = scmp.lt.s32.totalorder %s17, 3
      %p244 = pnand %p242, %p243
      %p245 = pneg %p244
      // Predicated region
      $region41: #{tpu_custom_call.1} parent=5 // pred_check
        _
      $region42: #{tpu_custom_call.1} parent=5 // pred_check_branch
        %247 = sbr.rel (%p244) target = $region44
      $region43: #{tpu_custom_call.1} parent=5 // pred_region
        %s248 = ssub.s32 %s17, 1
        // Predicated region
        $region45: #{tpu_custom_call.1} parent=43 // pred_check
          %p249 = pneg %p90
        $region46: #{tpu_custom_call.1} parent=43 // pred_check_branch
          %251 = sbr.rel (%p249) target = $region48
        $region47: #{tpu_custom_call.1} parent=43 // pred_region
          %252 = dma.done [#allocation3], 256
        $region48: #{tpu_custom_call.1} parent=43 // pred_fallthru
          _
        // Predicated region
        $region49: #{tpu_custom_call.1} parent=43 // pred_check
          %p253 = pneg %p111
        $region50: #{tpu_custom_call.1} parent=43 // pred_check_branch
          %255 = sbr.rel (%p253) target = $region52
        $region51: #{tpu_custom_call.1} parent=43 // pred_region
          %256 = dma.done [#allocation6], 32
        $region52: #{tpu_custom_call.1} parent=43 // pred_fallthru
          _
        %p257 = scmp.lt.s32.totalorder %s22, 1
        %s258 = scalar_select %p257, %s22, 1
        %s259 = smul.addr %s258, 8
        %s260 = scalar_lea.vmem %s0, %s259
        %p261 = pneg %p43
        %p262 = pneg %p40
        %p263 = scmp.lt.s32.totalorder %s22, 1
        %s264 = scalar_select %p263, %s22, 1
        %s265 = smul.addr %s264, 8
        %s266 = scalar_lea.vmem %s1, %s265
        %p267 = pneg %p69
        %p268 = pneg %p66
        %p269 = pneg %p90
        %p270 = pneg %p87
        %p271 = pneg %p111
        %p272 = pneg %p108
        %p273 = pneg %p132
        %p274 = pneg %p129
        %p275 = pneg %p153
        %p276 = pneg %p150
        %p277 = pneg %p179
        %p278 = pneg %p176
        %s279 = sand.u32 %s166, 1
        %s280 = scalar_lea.sflag [#allocation4], %s279
        %s281 = sand.u32 %s166, 1
        %s282 = smul.addr %s281, 8
        %s283 = scalar_lea.vmem [#allocation7], %s282
        %p284 = scmp.lt.s32.totalorder %s22, 1
        %s285 = scalar_select %p284, %s22, 1
        %s286 = smul.addr %s285, 8
        %s287 = scalar_lea.vmem %s0, %s286
        %p288 = scmp.lt.s32.totalorder %s22, 1
        %s289 = scalar_select %p288, %s22, 1
        %s290 = smul.addr %s289, 8
        %s291 = scalar_lea.vmem %s1, %s290
        %v293 = vld [vmem:[%s287] sm:$0xff]
        %v294 = vld [vmem:[%s291] sm:$0xff]
        %v295 = vld [vmem:[#allocation5] sm:$0x3]
        %v296 = vpack.c.bf16 %v293, %v293
        %v297 = vld [vmem:[#allocation2] sm:$0xf]
        %v298 = vld [vmem:[#allocation2 + $0x4] sm:$0xf]
        %v299 = vld [vmem:[#allocation2 + $0x8] sm:$0xf]
        %v300 = vld [vmem:[#allocation2 + $0xc] sm:$0xf]
        %302 = vset.pattern.permute.xlu0 0
        %303 = vperm.xlu0 %302, %v294
        %v304 = vpop.permute.xlu0 %303
        %v306 = vlaneseq
        %v307 = vshrl.u32 %v306, 7
        %v308 = vsub.s32 0, %v307
        %v309 = vrot.slane %v295, %v308
        %v310 = vmul.f32 %v304, %v309
        %v315 = vunpack.c.l.b16 %v297
        %v316 = vunpack.c.l.b16 %v298
        %v317 = vunpack.c.l.b16 %v299
        %v318 = vunpack.c.l.b16 %v300
        %v319 = vpack.c.b16 %v316, %v315
        %v320 = vpack.c.b16 %v318, %v317
        %vm323 = vcmask 261120
        %v325 = vsel %vm323, %v296, 0
        %327 = vmatprep.subr.bf16.mxu0 0
        %328 = vmatpush1.bf16.msra.mxu0 %v319
        %329 = vmatprep.subr.bf16.mxu0 0
        %330 = vmatpush1.bf16.msra.mxu0 %v320
        %331 = vmatprep.subr.bf16.mxu0 0
        %332 = vmatpush1.bf16.msra.mxu0 0
        %333 = vmatprep.subr.bf16.mxu0 0
        %334 = vmatpush1.bf16.msra.mxu0 0
        %335 = vmatprep.subr.bf16.mxu0 0
        %336 = vmatpush1.bf16.msra.mxu0 0
        %337 = vmatprep.subr.bf16.mxu0 0
        %338 = vmatpush1.bf16.msra.mxu0 0
        %339 = vmatprep.subr.bf16.mxu0 0
        %340 = vmatpush1.bf16.msra.mxu0 0
        %341 = vmatprep.subr.bf16.mxu0 0
        %342 = vmatpush1.bf16.msra.mxu0 0
        %343 = vmatprep.subr.bf16.mxu0 0
        %344 = vmatpush1.bf16.msra.mxu0 0
        %345 = vmatprep.subr.bf16.mxu0 0
        %346 = vmatpush1.bf16.msra.mxu0 0
        %347 = vmatprep.subr.bf16.mxu0 0
        %348 = vmatpush1.bf16.msra.mxu0 0
        %349 = vmatprep.subr.bf16.mxu0 0
        %350 = vmatpush1.bf16.msra.mxu0 0
        %351 = vmatprep.subr.bf16.mxu0 0
        %352 = vmatpush1.bf16.msra.mxu0 0
        %353 = vmatprep.subr.bf16.mxu0 0
        %354 = vmatpush1.bf16.msra.mxu0 0
        %355 = vmatprep.subr.bf16.mxu0 0
        %356 = vmatpush1.bf16.msra.mxu0 0
        %357 = vmatprep.subr.bf16.mxu0 0
        %358 = vmatpush1.bf16.msra.mxu0 0
        %359 = vmatprep.mubr.bf16.mxu0 0
        %360 = vmatmul.mubr.bf16.gmra.mrb[0].mxu0 %v325
        %v361 = vpop.f32.mrb[0].mxu0
        %v362 = vadd.f32 %v310, %v361
        %v363 = vpop.f32.mrb[0].mxu0
        %v364 = vpop.f32.mrb[0].mxu0
        %v365 = vpop.f32.mrb[0].mxu0
        %366 = vdwg.mxu0
        %v367 = vlaneseq
        %v368 = vshrl.u32 %v367, 7
        %v369 = vsub.s32 1, %v368
        %v370 = vrot.slane %v295, %v369
        %v371 = vadd.f32 %v362, %v370
        %v372 = vpack.c.bf16 %v371, %v371
        %374 = vrot.lane.b32.xlu0 %v372, 96
        %v375 = vpop.permute.xlu0 %374
        %vm376 = vcmask 64512
        %v378 = vsel %vm376, %v372, 0
        %v381 = vsel %vm376, %v375, 0
        %383 = vmatprep.subr.bf16.mxu0 0
        %384 = vmatpush1.bf16.xpose.msra.mxu0 %v381
        %385 = vmatprep.subr.bf16.mxu0 0
        %386 = vmatpush1.bf16.xpose.msra.mxu0 0
        %387 = vmatprep.subr.bf16.mxu0 0
        %388 = vmatpush1.bf16.xpose.msra.mxu0 0
        %389 = vmatprep.subr.bf16.mxu0 0
        %390 = vmatpush1.bf16.xpose.msra.mxu0 0
        %391 = vmatprep.subr.bf16.mxu0 0
        %392 = vmatpush1.bf16.xpose.msra.mxu0 0
        %393 = vmatprep.subr.bf16.mxu0 0
        %394 = vmatpush1.bf16.xpose.msra.mxu0 0
        %395 = vmatprep.subr.bf16.mxu0 0
        %396 = vmatpush1.bf16.xpose.msra.mxu0 0
        %397 = vmatprep.subr.bf16.mxu0 0
        %398 = vmatpush1.bf16.xpose.msra.mxu0 0
        %399 = vmatprep.subr.bf16.mxu0 0
        %400 = vmatpush1.bf16.xpose.msra.mxu0 0
        %401 = vmatprep.subr.bf16.mxu0 0
        %402 = vmatpush1.bf16.xpose.msra.mxu0 0
        %403 = vmatprep.subr.bf16.mxu0 0
        %404 = vmatpush1.bf16.xpose.msra.mxu0 0
        %405 = vmatprep.subr.bf16.mxu0 0
        %406 = vmatpush1.bf16.xpose.msra.mxu0 0
        %407 = vmatprep.subr.bf16.mxu0 0
        %408 = vmatpush1.bf16.xpose.msra.mxu0 0
        %409 = vmatprep.subr.bf16.mxu0 0
        %410 = vmatpush1.bf16.xpose.msra.mxu0 0
        %411 = vmatprep.subr.bf16.mxu0 0
        %412 = vmatpush1.bf16.xpose.msra.mxu0 0
        %413 = vmatprep.subr.bf16.mxu0 0
        %414 = vmatpush1.bf16.xpose.msra.mxu0 0
        %415 = vmatprep.mubr.bf16.mxu0 0
        %416 = vmatmul.mubr.bf16.gmra.mrb[0].mxu0 %v378
        %v417 = vpop.f32.mrb[0].mxu0
        %v418 = vadd.f32 0.0, %v417
        %v419 = vpop.f32.mrb[0].mxu0
        %v420 = vpop.f32.mrb[0].mxu0
        %v421 = vpop.f32.mrb[0].mxu0
        %422 = vdwg.mxu0
        %v423 = vmul.f32 %v418, 0.35355338
        %v424 = vsel %vm376, %v423, -inf
        %425 = vmax.xlane.f32.xlu0 %v424
        %v426 = vpop.xlane.xlu0 %425
        %v427 = vsub.f32 %v423, %v426
        %v428 = vmul.f32 %v427, 1.442695
        %v429 = vpow.pop %v428
        %v430 = vsel %vm376, %v429, 0.0
        %431 = vadd.xlane.f32.xlu0 %v430
        %v432 = vpop.xlane.xlu0 %431
        %v433 = vrcp.pop %v432
        %v434 = vmul.f32 %v429, %v433
        %v435 = vpack.c.bf16 %v434, %v434
        %436 = vrot.lane.b32.xlu0 %v372, 64
        %v437 = vpop.permute.xlu0 %436
        %v439 = vsel %vm376, %v435, 0
        %vm441 = vcmask 1043456
        %v443 = vsel %vm441, %v437, 0
        %445 = vmatprep.subr.bf16.mxu0 0
        %446 = vmatpush1.bf16.msra.mxu0 %v443
        %447 = vmatprep.subr.bf16.mxu0 0
        %448 = vmatpush1.bf16.msra.mxu0 0
        %449 = vmatprep.subr.bf16.mxu0 0
        %450 = vmatpush1.bf16.msra.mxu0 0
        %451 = vmatprep.subr.bf16.mxu0 0
        %452 = vmatpush1.bf16.msra.mxu0 0
        %453 = vmatprep.subr.bf16.mxu0 0
        %454 = vmatpush1.bf16.msra.mxu0 0
        %455 = vmatprep.subr.bf16.mxu0 0
        %456 = vmatpush1.bf16.msra.mxu0 0
        %457 = vmatprep.subr.bf16.mxu0 0
        %458 = vmatpush1.bf16.msra.mxu0 0
        %459 = vmatprep.subr.bf16.mxu0 0
        %460 = vmatpush1.bf16.msra.mxu0 0
        %461 = vmatprep.subr.bf16.mxu0 0
        %462 = vmatpush1.bf16.msra.mxu0 0
        %463 = vmatprep.subr.bf16.mxu0 0
        %464 = vmatpush1.bf16.msra.mxu0 0
        %465 = vmatprep.subr.bf16.mxu0 0
        %466 = vmatpush1.bf16.msra.mxu0 0
        %467 = vmatprep.subr.bf16.mxu0 0
        %468 = vmatpush1.bf16.msra.mxu0 0
        %469 = vmatprep.subr.bf16.mxu0 0
        %470 = vmatpush1.bf16.msra.mxu0 0
        %471 = vmatprep.subr.bf16.mxu0 0
        %472 = vmatpush1.bf16.msra.mxu0 0
        %473 = vmatprep.subr.bf16.mxu0 0
        %474 = vmatpush1.bf16.msra.mxu0 0
        %475 = vmatprep.subr.bf16.mxu0 0
        %476 = vmatpush1.bf16.msra.mxu0 0
        %477 = vmatprep.mubr.bf16.mxu0 0
        %478 = vmatmul.mubr.bf16.gmra.mrb[0].mxu0 %v439
        %v479 = vpop.f32.mrb[0].mxu0
        %v480 = vadd.f32 0.0, %v479
        %v481 = vpop.f32.mrb[0].mxu0
        %v482 = vpop.f32.mrb[0].mxu0
        %v483 = vpop.f32.mrb[0].mxu0
        %484 = vdwg.mxu0
        %v485 = vpack.c.bf16 %v480, %v480
        %v486 = vld [vmem:[%s4] sm:$0xf]
        %487 = vrot.lane.b32.xlu0 %v372, 120
        %v488 = vpop.permute.xlu0 %487
        %489 = vrot.lane.b32.xlu0 %v372, 88
        %v490 = vpop.permute.xlu0 %489
        %v492 = vsel %vm376, %v488, 0
        %v495 = vsel %vm376, %v490, 0
        %497 = vmatprep.subr.bf16.mxu0 0
        %498 = vmatpush1.bf16.xpose.msra.mxu0 %v495
        %499 = vmatprep.subr.bf16.mxu0 0
        %500 = vmatpush1.bf16.xpose.msra.mxu0 0
        %501 = vmatprep.subr.bf16.mxu0 0
        %502 = vmatpush1.bf16.xpose.msra.mxu0 0
        %503 = vmatprep.subr.bf16.mxu0 0
        %504 = vmatpush1.bf16.xpose.msra.mxu0 0
        %505 = vmatprep.subr.bf16.mxu0 0
        %506 = vmatpush1.bf16.xpose.msra.mxu0 0
        %507 = vmatprep.subr.bf16.mxu0 0
        %508 = vmatpush1.bf16.xpose.msra.mxu0 0
        %509 = vmatprep.subr.bf16.mxu0 0
        %510 = vmatpush1.bf16.xpose.msra.mxu0 0
        %511 = vmatprep.subr.bf16.mxu0 0
        %512 = vmatpush1.bf16.xpose.msra.mxu0 0
        %513 = vmatprep.subr.bf16.mxu0 0
        %514 = vmatpush1.bf16.xpose.msra.mxu0 0
        %515 = vmatprep.subr.bf16.mxu0 0
        %516 = vmatpush1.bf16.xpose.msra.mxu0 0
        %517 = vmatprep.subr.bf16.mxu0 0
        %518 = vmatpush1.bf16.xpose.msra.mxu0 0
        %519 = vmatprep.subr.bf16.mxu0 0
        %520 = vmatpush1.bf16.xpose.msra.mxu0 0
        %521 = vmatprep.subr.bf16.mxu0 0
        %522 = vmatpush1.bf16.xpose.msra.mxu0 0
        %523 = vmatprep.subr.bf16.mxu0 0
        %524 = vmatpush1.bf16.xpose.msra.mxu0 0
        %525 = vmatprep.subr.bf16.mxu0 0
        %526 = vmatpush1.bf16.xpose.msra.mxu0 0
        %527 = vmatprep.subr.bf16.mxu0 0
        %528 = vmatpush1.bf16.xpose.msra.mxu0 0
        %529 = vmatprep.mubr.bf16.mxu0 0
        %530 = vmatmul.mubr.bf16.gmra.mrb[0].mxu0 %v492
        %v531 = vpop.f32.mrb[0].mxu0
        %v532 = vadd.f32 0.0, %v531
        %v533 = vpop.f32.mrb[0].mxu0
        %v534 = vpop.f32.mrb[0].mxu0
        %v535 = vpop.f32.mrb[0].mxu0
        %536 = vdwg.mxu0
        %v537 = vmul.f32 %v532, 0.35355338
        %v538 = vsel %vm376, %v537, -inf
        %539 = vmax.xlane.f32.xlu0 %v538
        %v540 = vpop.xlane.xlu0 %539
        %v541 = vsub.f32 %v537, %v540
        %v542 = vmul.f32 %v541, 1.442695
        %v543 = vpow.pop %v542
        %v544 = vsel %vm376, %v543, 0.0
        %545 = vadd.xlane.f32.xlu0 %v544
        %v546 = vpop.xlane.xlu0 %545
        %v547 = vrcp.pop %v546
        %v548 = vmul.f32 %v543, %v547
        %v549 = vpack.c.bf16 %v548, %v548
        %550 = vrot.lane.b32.xlu0 %v372, 56
        %v551 = vpop.permute.xlu0 %550
        %v553 = vsel %vm376, %v549, 0
        %v556 = vsel %vm441, %v551, 0
        %558 = vmatprep.subr.bf16.mxu0 0
        %559 = vmatpush1.bf16.msra.mxu0 %v556
        %560 = vmatprep.subr.bf16.mxu0 0
        %561 = vmatpush1.bf16.msra.mxu0 0
        %562 = vmatprep.subr.bf16.mxu0 0
        %563 = vmatpush1.bf16.msra.mxu0 0
        %564 = vmatprep.subr.bf16.mxu0 0
        %565 = vmatpush1.bf16.msra.mxu0 0
        %566 = vmatprep.subr.bf16.mxu0 0
        %567 = vmatpush1.bf16.msra.mxu0 0
        %568 = vmatprep.subr.bf16.mxu0 0
        %569 = vmatpush1.bf16.msra.mxu0 0
        %570 = vmatprep.subr.bf16.mxu0 0
        %571 = vmatpush1.bf16.msra.mxu0 0
        %572 = vmatprep.subr.bf16.mxu0 0
        %573 = vmatpush1.bf16.msra.mxu0 0
        %574 = vmatprep.subr.bf16.mxu0 0
        %575 = vmatpush1.bf16.msra.mxu0 0
        %576 = vmatprep.subr.bf16.mxu0 0
        %577 = vmatpush1.bf16.msra.mxu0 0
        %578 = vmatprep.subr.bf16.mxu0 0
        %579 = vmatpush1.bf16.msra.mxu0 0
        %580 = vmatprep.subr.bf16.mxu0 0
        %581 = vmatpush1.bf16.msra.mxu0 0
        %582 = vmatprep.subr.bf16.mxu0 0
        %583 = vmatpush1.bf16.msra.mxu0 0
        %584 = vmatprep.subr.bf16.mxu0 0
        %585 = vmatpush1.bf16.msra.mxu0 0
        %586 = vmatprep.subr.bf16.mxu0 0
        %587 = vmatpush1.bf16.msra.mxu0 0
        %588 = vmatprep.subr.bf16.mxu0 0
        %589 = vmatpush1.bf16.msra.mxu0 0
        %590 = vmatprep.mubr.bf16.mxu0 0
        %591 = vmatmul.mubr.bf16.gmra.mrb[0].mxu0 %v553
        %v592 = vpop.f32.mrb[0].mxu0
        %v593 = vadd.f32 0.0, %v592
        %v594 = vpop.f32.mrb[0].mxu0
        %v595 = vpop.f32.mrb[0].mxu0
        %v596 = vpop.f32.mrb[0].mxu0
        %597 = vdwg.mxu0
        %v598 = vpack.c.bf16 %v593, %v593
        %v599 = vld [vmem:[%s4 + $0x4] sm:$0xf]
        %v601 = vsel %vm376, %v598, 0
        %v604 = vsel %vm441, %v599, 0
        %606 = vmatprep.subr.bf16.mxu0 0
        %607 = vmatpush1.bf16.msra.mxu0 %v604
        %608 = vmatprep.subr.bf16.mxu0 0
        %609 = vmatpush1.bf16.msra.mxu0 0
        %610 = vmatprep.subr.bf16.mxu0 0
        %611 = vmatpush1.bf16.msra.mxu0 0
        %612 = vmatprep.subr.bf16.mxu0 0
        %613 = vmatpush1.bf16.msra.mxu0 0
        %614 = vmatprep.subr.bf16.mxu0 0
        %615 = vmatpush1.bf16.msra.mxu0 0
        %616 = vmatprep.subr.bf16.mxu0 0
        %617 = vmatpush1.bf16.msra.mxu0 0
        %618 = vmatprep.subr.bf16.mxu0 0
        %619 = vmatpush1.bf16.msra.mxu0 0
        %620 = vmatprep.subr.bf16.mxu0 0
        %621 = vmatpush1.bf16.msra.mxu0 0
        %622 = vmatprep.subr.bf16.mxu0 0
        %623 = vmatpush1.bf16.msra.mxu0 0
        %624 = vmatprep.subr.bf16.mxu0 0
        %625 = vmatpush1.bf16.msra.mxu0 0
        %626 = vmatprep.subr.bf16.mxu0 0
        %627 = vmatpush1.bf16.msra.mxu0 0
        %628 = vmatprep.subr.bf16.mxu0 0
        %629 = vmatpush1.bf16.msra.mxu0 0
        %630 = vmatprep.subr.bf16.mxu0 0
        %631 = vmatpush1.bf16.msra.mxu0 0
        %632 = vmatprep.subr.bf16.mxu0 0
        %633 = vmatpush1.bf16.msra.mxu0 0
        %634 = vmatprep.subr.bf16.mxu0 0
        %635 = vmatpush1.bf16.msra.mxu0 0
        %636 = vmatprep.subr.bf16.mxu0 0
        %637 = vmatpush1.bf16.msra.mxu0 0
        %638 = vmatprep.mubr.bf16.mxu0 0
        %639 = vmatmul.mubr.bf16.gmra.mrb[0].mxu0 %v601
        %v640 = vpop.f32.mrb[0].mxu0
        %v641 = vadd.f32 0.0, %v640
        %v642 = vpop.f32.mrb[0].mxu0
        %v643 = vpop.f32.mrb[0].mxu0
        %v644 = vpop.f32.mrb[0].mxu0
        %645 = vdwg.mxu0
        %v647 = vsel %vm376, %v485, 0
        %v650 = vsel %vm441, %v486, 0
        %652 = vmatprep.subr.bf16.mxu0 0
        %653 = vmatpush1.bf16.msra.mxu0 %v650
        %654 = vmatprep.subr.bf16.mxu0 0
        %655 = vmatpush1.bf16.msra.mxu0 0
        %656 = vmatprep.subr.bf16.mxu0 0
        %657 = vmatpush1.bf16.msra.mxu0 0
        %658 = vmatprep.subr.bf16.mxu0 0
        %659 = vmatpush1.bf16.msra.mxu0 0
        %660 = vmatprep.subr.bf16.mxu0 0
        %661 = vmatpush1.bf16.msra.mxu0 0
        %662 = vmatprep.subr.bf16.mxu0 0
        %663 = vmatpush1.bf16.msra.mxu0 0
        %664 = vmatprep.subr.bf16.mxu0 0
        %665 = vmatpush1.bf16.msra.mxu0 0
        %666 = vmatprep.subr.bf16.mxu0 0
        %667 = vmatpush1.bf16.msra.mxu0 0
        %668 = vmatprep.subr.bf16.mxu0 0
        %669 = vmatpush1.bf16.msra.mxu0 0
        %670 = vmatprep.subr.bf16.mxu0 0
        %671 = vmatpush1.bf16.msra.mxu0 0
        %672 = vmatprep.subr.bf16.mxu0 0
        %673 = vmatpush1.bf16.msra.mxu0 0
        %674 = vmatprep.subr.bf16.mxu0 0
        %675 = vmatpush1.bf16.msra.mxu0 0
        %676 = vmatprep.subr.bf16.mxu0 0
        %677 = vmatpush1.bf16.msra.mxu0 0
        %678 = vmatprep.subr.bf16.mxu0 0
        %679 = vmatpush1.bf16.msra.mxu0 0
        %680 = vmatprep.subr.bf16.mxu0 0
        %681 = vmatpush1.bf16.msra.mxu0 0
        %682 = vmatprep.subr.bf16.mxu0 0
        %683 = vmatpush1.bf16.msra.mxu0 0
        %684 = vmatprep.mubr.bf16.mxu0 0
        %685 = vmatmul.mubr.bf16.gmra.mrb[0].mxu0 %v647
        %v686 = vpop.f32.mrb[0].mxu0
        %v687 = vadd.f32 %v641, %v686
        %v688 = vpop.f32.mrb[0].mxu0
        %v689 = vpop.f32.mrb[0].mxu0
        %v690 = vpop.f32.mrb[0].mxu0
        %691 = vdwg.mxu0
        %692 = vrot.lane.b32.xlu0 %v372, 112
        %v693 = vpop.permute.xlu0 %692
        %694 = vrot.lane.b32.xlu0 %v372, 80
        %v695 = vpop.permute.xlu0 %694
        %v697 = vsel %vm376, %v693, 0
        %v700 = vsel %vm376, %v695, 0
        %702 = vmatprep.subr.bf16.mxu0 0
        %703 = vmatpush1.bf16.xpose.msra.mxu0 %v700
        %704 = vmatprep.subr.bf16.mxu0 0
        %705 = vmatpush1.bf16.xpose.msra.mxu0 0
        %706 = vmatprep.subr.bf16.mxu0 0
        %707 = vmatpush1.bf16.xpose.msra.mxu0 0
        %708 = vmatprep.subr.bf16.mxu0 0
        %709 = vmatpush1.bf16.xpose.msra.mxu0 0
        %710 = vmatprep.subr.bf16.mxu0 0
        %711 = vmatpush1.bf16.xpose.msra.mxu0 0
        %712 = vmatprep.subr.bf16.mxu0 0
        %713 = vmatpush1.bf16.xpose.msra.mxu0 0
        %714 = vmatprep.subr.bf16.mxu0 0
        %715 = vmatpush1.bf16.xpose.msra.mxu0 0
        %716 = vmatprep.subr.bf16.mxu0 0
        %717 = vmatpush1.bf16.xpose.msra.mxu0 0
        %718 = vmatprep.subr.bf16.mxu0 0
        %719 = vmatpush1.bf16.xpose.msra.mxu0 0
        %720 = vmatprep.subr.bf16.mxu0 0
        %721 = vmatpush1.bf16.xpose.msra.mxu0 0
        %722 = vmatprep.subr.bf16.mxu0 0
        %723 = vmatpush1.bf16.xpose.msra.mxu0 0
        %724 = vmatprep.subr.bf16.mxu0 0
        %725 = vmatpush1.bf16.xpose.msra.mxu0 0
        %726 = vmatprep.subr.bf16.mxu0 0
        %727 = vmatpush1.bf16.xpose.msra.mxu0 0
        %728 = vmatprep.subr.bf16.mxu0 0
        %729 = vmatpush1.bf16.xpose.msra.mxu0 0
        %730 = vmatprep.subr.bf16.mxu0 0
        %731 = vmatpush1.bf16.xpose.msra.mxu0 0
        %732 = vmatprep.subr.bf16.mxu0 0
        %733 = vmatpush1.bf16.xpose.msra.mxu0 0
        %734 = vmatprep.mubr.bf16.mxu0 0
        %735 = vmatmul.mubr.bf16.gmra.mrb[0].mxu0 %v697
        %v736 = vpop.f32.mrb[0].mxu0
        %v737 = vadd.f32 0.0, %v736
        %v738 = vpop.f32.mrb[0].mxu0
        %v739 = vpop.f32.mrb[0].mxu0
        %v740 = vpop.f32.mrb[0].mxu0
        %741 = vdwg.mxu0
        %v742 = vmul.f32 %v737, 0.35355338
        %v743 = vsel %vm376, %v742, -inf
        %744 = vmax.xlane.f32.xlu0 %v743
        %v745 = vpop.xlane.xlu0 %744
        %v746 = vsub.f32 %v742, %v745
        %v747 = vmul.f32 %v746, 1.442695
        %v748 = vpow.pop %v747
        %v749 = vsel %vm376, %v748, 0.0
        %750 = vadd.xlane.f32.xlu0 %v749
        %v751 = vpop.xlane.xlu0 %750
        %v752 = vrcp.pop %v751
        %v753 = vmul.f32 %v748, %v752
        %v754 = vpack.c.bf16 %v753, %v753
        %755 = vrot.lane.b32.xlu0 %v372, 48
        %v756 = vpop.permute.xlu0 %755
        %v758 = vsel %vm376, %v754, 0
        %v761 = vsel %vm441, %v756, 0
        %763 = vmatprep.subr.bf16.mxu0 0
        %764 = vmatpush1.bf16.msra.mxu0 %v761
        %765 = vmatprep.subr.bf16.mxu0 0
        %766 = vmatpush1.bf16.msra.mxu0 0
        %767 = vmatprep.subr.bf16.mxu0 0
        %768 = vmatpush1.bf16.msra.mxu0 0
        %769 = vmatprep.subr.bf16.mxu0 0
        %770 = vmatpush1.bf16.msra.mxu0 0
        %771 = vmatprep.subr.bf16.mxu0 0
        %772 = vmatpush1.bf16.msra.mxu0 0
        %773 = vmatprep.subr.bf16.mxu0 0
        %774 = vmatpush1.bf16.msra.mxu0 0
        %775 = vmatprep.subr.bf16.mxu0 0
        %776 = vmatpush1.bf16.msra.mxu0 0
        %777 = vmatprep.subr.bf16.mxu0 0
        %778 = vmatpush1.bf16.msra.mxu0 0
        %779 = vmatprep.subr.bf16.mxu0 0
        %780 = vmatpush1.bf16.msra.mxu0 0
        %781 = vmatprep.subr.bf16.mxu0 0
        %782 = vmatpush1.bf16.msra.mxu0 0
        %783 = vmatprep.subr.bf16.mxu0 0
        %784 = vmatpush1.bf16.msra.mxu0 0
        %785 = vmatprep.subr.bf16.mxu0 0
        %786 = vmatpush1.bf16.msra.mxu0 0
        %787 = vmatprep.subr.bf16.mxu0 0
        %788 = vmatpush1.bf16.msra.mxu0 0
        %789 = vmatprep.subr.bf16.mxu0 0
        %790 = vmatpush1.bf16.msra.mxu0 0
        %791 = vmatprep.subr.bf16.mxu0 0
        %792 = vmatpush1.bf16.msra.mxu0 0
        %793 = vmatprep.subr.bf16.mxu0 0
        %794 = vmatpush1.bf16.msra.mxu0 0
        %795 = vmatprep.mubr.bf16.mxu0 0
        %796 = vmatmul.mubr.bf16.gmra.mrb[0].mxu0 %v758
        %v797 = vpop.f32.mrb[0].mxu0
        %v798 = vadd.f32 0.0, %v797
        %v799 = vpop.f32.mrb[0].mxu0
        %v800 = vpop.f32.mrb[0].mxu0
        %v801 = vpop.f32.mrb[0].mxu0
        %802 = vdwg.mxu0
        %v803 = vpack.c.bf16 %v798, %v798
        %v804 = vld [vmem:[%s4 + $0x8] sm:$0xf]
        %v806 = vsel %vm376, %v803, 0
        %v809 = vsel %vm441, %v804, 0
        %811 = vmatprep.subr.bf16.mxu0 0
        %812 = vmatpush1.bf16.msra.mxu0 %v809
        %813 = vmatprep.subr.bf16.mxu0 0
        %814 = vmatpush1.bf16.msra.mxu0 0
        %815 = vmatprep.subr.bf16.mxu0 0
        %816 = vmatpush1.bf16.msra.mxu0 0
        %817 = vmatprep.subr.bf16.mxu0 0
        %818 = vmatpush1.bf16.msra.mxu0 0
        %819 = vmatprep.subr.bf16.mxu0 0
        %820 = vmatpush1.bf16.msra.mxu0 0
        %821 = vmatprep.subr.bf16.mxu0 0
        %822 = vmatpush1.bf16.msra.mxu0 0
        %823 = vmatprep.subr.bf16.mxu0 0
        %824 = vmatpush1.bf16.msra.mxu0 0
        %825 = vmatprep.subr.bf16.mxu0 0
        %826 = vmatpush1.bf16.msra.mxu0 0
        %827 = vmatprep.subr.bf16.mxu0 0
        %828 = vmatpush1.bf16.msra.mxu0 0
        %829 = vmatprep.subr.bf16.mxu0 0
        %830 = vmatpush1.bf16.msra.mxu0 0
        %831 = vmatprep.subr.bf16.mxu0 0
        %832 = vmatpush1.bf16.msra.mxu0 0
        %833 = vmatprep.subr.bf16.mxu0 0
        %834 = vmatpush1.bf16.msra.mxu0 0
        %835 = vmatprep.subr.bf16.mxu0 0
        %836 = vmatpush1.bf16.msra.mxu0 0
        %837 = vmatprep.subr.bf16.mxu0 0
        %838 = vmatpush1.bf16.msra.mxu0 0
        %839 = vmatprep.subr.bf16.mxu0 0
        %840 = vmatpush1.bf16.msra.mxu0 0
        %841 = vmatprep.subr.bf16.mxu0 0
        %842 = vmatpush1.bf16.msra.mxu0 0
        %843 = vmatprep.mubr.bf16.mxu0 0
        %844 = vmatmul.mubr.bf16.gmra.mrb[0].mxu0 %v806
        %v845 = vpop.f32.mrb[0].mxu0
        %v846 = vadd.f32 0.0, %v845
        %v847 = vpop.f32.mrb[0].mxu0
        %v848 = vpop.f32.mrb[0].mxu0
        %v849 = vpop.f32.mrb[0].mxu0
        %850 = vdwg.mxu0
        %v851 = vadd.f32 %v687, %v846
        %852 = vrot.lane.b32.xlu0 %v372, 104
        %v853 = vpop.permute.xlu0 %852
        %854 = vrot.lane.b32.xlu0 %v372, 72
        %v855 = vpop.permute.xlu0 %854
        %v857 = vsel %vm376, %v853, 0
        %v860 = vsel %vm376, %v855, 0
        %862 = vmatprep.subr.bf16.mxu0 0
        %863 = vmatpush1.bf16.xpose.msra.mxu0 %v860
        %864 = vmatprep.subr.bf16.mxu0 0
        %865 = vmatpush1.bf16.xpose.msra.mxu0 0
        %866 = vmatprep.subr.bf16.mxu0 0
        %867 = vmatpush1.bf16.xpose.msra.mxu0 0
        %868 = vmatprep.subr.bf16.mxu0 0
        %869 = vmatpush1.bf16.xpose.msra.mxu0 0
        %870 = vmatprep.subr.bf16.mxu0 0
        %871 = vmatpush1.bf16.xpose.msra.mxu0 0
        %872 = vmatprep.subr.bf16.mxu0 0
        %873 = vmatpush1.bf16.xpose.msra.mxu0 0
        %874 = vmatprep.subr.bf16.mxu0 0
        %875 = vmatpush1.bf16.xpose.msra.mxu0 0
        %876 = vmatprep.subr.bf16.mxu0 0
        %877 = vmatpush1.bf16.xpose.msra.mxu0 0
        %878 = vmatprep.subr.bf16.mxu0 0
        %879 = vmatpush1.bf16.xpose.msra.mxu0 0
        %880 = vmatprep.subr.bf16.mxu0 0
        %881 = vmatpush1.bf16.xpose.msra.mxu0 0
        %882 = vmatprep.subr.bf16.mxu0 0
        %883 = vmatpush1.bf16.xpose.msra.mxu0 0
        %884 = vmatprep.subr.bf16.mxu0 0
        %885 = vmatpush1.bf16.xpose.msra.mxu0 0
        %886 = vmatprep.subr.bf16.mxu0 0
        %887 = vmatpush1.bf16.xpose.msra.mxu0 0
        %888 = vmatprep.subr.bf16.mxu0 0
        %889 = vmatpush1.bf16.xpose.msra.mxu0 0
        %890 = vmatprep.subr.bf16.mxu0 0
        %891 = vmatpush1.bf16.xpose.msra.mxu0 0
        %892 = vmatprep.subr.bf16.mxu0 0
        %893 = vmatpush1.bf16.xpose.msra.mxu0 0
        %894 = vmatprep.mubr.bf16.mxu0 0
        %895 = vmatmul.mubr.bf16.gmra.mrb[0].mxu0 %v857
        %v896 = vpop.f32.mrb[0].mxu0
        %v897 = vadd.f32 0.0, %v896
        %v898 = vpop.f32.mrb[0].mxu0
        %v899 = vpop.f32.mrb[0].mxu0
        %v900 = vpop.f32.mrb[0].mxu0
        %901 = vdwg.mxu0
        %v902 = vmul.f32 %v897, 0.35355338
        %v903 = vsel %vm376, %v902, -inf
        %904 = vmax.xlane.f32.xlu0 %v903
        %v905 = vpop.xlane.xlu0 %904
        %v906 = vsub.f32 %v902, %v905
        %v907 = vmul.f32 %v906, 1.442695
        %v908 = vpow.pop %v907
        %v909 = vsel %vm376, %v908, 0.0
        %910 = vadd.xlane.f32.xlu0 %v909
        %v911 = vpop.xlane.xlu0 %910
        %v912 = vrcp.pop %v911
        %v913 = vmul.f32 %v908, %v912
        %v914 = vpack.c.bf16 %v913, %v913
        %915 = vrot.lane.b32.xlu0 %v372, 40
        %v916 = vpop.permute.xlu0 %915
        %v918 = vsel %vm376, %v914, 0
        %v921 = vsel %vm441, %v916, 0
        %923 = vmatprep.subr.bf16.mxu0 0
        %924 = vmatpush1.bf16.msra.mxu0 %v921
        %925 = vmatprep.subr.bf16.mxu0 0
        %926 = vmatpush1.bf16.msra.mxu0 0
        %927 = vmatprep.subr.bf16.mxu0 0
        %928 = vmatpush1.bf16.msra.mxu0 0
        %929 = vmatprep.subr.bf16.mxu0 0
        %930 = vmatpush1.bf16.msra.mxu0 0
        %931 = vmatprep.subr.bf16.mxu0 0
        %932 = vmatpush1.bf16.msra.mxu0 0
        %933 = vmatprep.subr.bf16.mxu0 0
        %934 = vmatpush1.bf16.msra.mxu0 0
        %935 = vmatprep.subr.bf16.mxu0 0
        %936 = vmatpush1.bf16.msra.mxu0 0
        %937 = vmatprep.subr.bf16.mxu0 0
        %938 = vmatpush1.bf16.msra.mxu0 0
        %939 = vmatprep.subr.bf16.mxu0 0
        %940 = vmatpush1.bf16.msra.mxu0 0
        %941 = vmatprep.subr.bf16.mxu0 0
        %942 = vmatpush1.bf16.msra.mxu0 0
        %943 = vmatprep.subr.bf16.mxu0 0
        %944 = vmatpush1.bf16.msra.mxu0 0
        %945 = vmatprep.subr.bf16.mxu0 0
        %946 = vmatpush1.bf16.msra.mxu0 0
        %947 = vmatprep.subr.bf16.mxu0 0
        %948 = vmatpush1.bf16.msra.mxu0 0
        %949 = vmatprep.subr.bf16.mxu0 0
        %950 = vmatpush1.bf16.msra.mxu0 0
        %951 = vmatprep.subr.bf16.mxu0 0
        %952 = vmatpush1.bf16.msra.mxu0 0
        %953 = vmatprep.subr.bf16.mxu0 0
        %954 = vmatpush1.bf16.msra.mxu0 0
        %955 = vmatprep.mubr.bf16.mxu0 0
        %956 = vmatmul.mubr.bf16.gmra.mrb[0].mxu0 %v918
        %v957 = vpop.f32.mrb[0].mxu0
        %v958 = vadd.f32 0.0, %v957
        %v959 = vpop.f32.mrb[0].mxu0
        %v960 = vpop.f32.mrb[0].mxu0
        %v961 = vpop.f32.mrb[0].mxu0
        %962 = vdwg.mxu0
        %v963 = vpack.c.bf16 %v958, %v958
        %v964 = vld [vmem:[%s4 + $0xc] sm:$0xf]
        %v966 = vsel %vm376, %v963, 0
        %v969 = vsel %vm441, %v964, 0
        %971 = vmatprep.subr.bf16.mxu0 0
        %972 = vmatpush1.bf16.msra.mxu0 %v969
        %973 = vmatprep.subr.bf16.mxu0 0
        %974 = vmatpush1.bf16.msra.mxu0 0
        %975 = vmatprep.subr.bf16.mxu0 0
        %976 = vmatpush1.bf16.msra.mxu0 0
        %977 = vmatprep.subr.bf16.mxu0 0
        %978 = vmatpush1.bf16.msra.mxu0 0
        %979 = vmatprep.subr.bf16.mxu0 0
        %980 = vmatpush1.bf16.msra.mxu0 0
        %981 = vmatprep.subr.bf16.mxu0 0
        %982 = vmatpush1.bf16.msra.mxu0 0
        %983 = vmatprep.subr.bf16.mxu0 0
        %984 = vmatpush1.bf16.msra.mxu0 0
        %985 = vmatprep.subr.bf16.mxu0 0
        %986 = vmatpush1.bf16.msra.mxu0 0
        %987 = vmatprep.subr.bf16.mxu0 0
        %988 = vmatpush1.bf16.msra.mxu0 0
        %989 = vmatprep.subr.bf16.mxu0 0
        %990 = vmatpush1.bf16.msra.mxu0 0
        %991 = vmatprep.subr.bf16.mxu0 0
        %992 = vmatpush1.bf16.msra.mxu0 0
        %993 = vmatprep.subr.bf16.mxu0 0
        %994 = vmatpush1.bf16.msra.mxu0 0
        %995 = vmatprep.subr.bf16.mxu0 0
        %996 = vmatpush1.bf16.msra.mxu0 0
        %997 = vmatprep.subr.bf16.mxu0 0
        %998 = vmatpush1.bf16.msra.mxu0 0
        %999 = vmatprep.subr.bf16.mxu0 0
        %1000 = vmatpush1.bf16.msra.mxu0 0
        %1001 = vmatprep.subr.bf16.mxu0 0
        %1002 = vmatpush1.bf16.msra.mxu0 0
        %1003 = vmatprep.mubr.bf16.mxu0 0
        %1004 = vmatmul.mubr.bf16.gmra.mrb[0].mxu0 %v966
        %v1005 = vpop.f32.mrb[0].mxu0
        %v1006 = vadd.f32 0.0, %v1005
        %v1007 = vpop.f32.mrb[0].mxu0
        %v1008 = vpop.f32.mrb[0].mxu0
        %v1009 = vpop.f32.mrb[0].mxu0
        %1010 = vdwg.mxu0
        %v1011 = vadd.f32 %v851, %v1006
        %v1012 = vld [vmem:[%s5] sm:$0x1]
        %v1014 = vlaneseq
        %v1015 = vshrl.u32 %v1014, 7
        %v1016 = vsub.s32 0, %v1015
        %v1017 = vrot.slane %v1012, %v1016
        %v1019 = vadd.f32 %v1011, %v1017
        %1020 = vst.msk [vmem:[%s283] sm:$0xff] %vm323, %v1019
        %s1021 = sand.u32 %s166, 1
        %s1022 = scalar_lea.sflag [#allocation4], %s1021
        %s1023 = sand.u32 %s166, 1
        %s1024 = smul.addr %s1023, 8
        %s1025 = scalar_lea.vmem [#allocation7], %s1024
        // Predicated region
        $region53: #{tpu_custom_call.1} parent=43 // pred_check
          %p1026 = pneg %p176
        $region54: #{tpu_custom_call.1} parent=43 // pred_check_branch
          %1028 = sbr.rel (%p1026) target = $region56
        $region55: #{tpu_custom_call.1} parent=43 // pred_region
          %s1030 = ssub.s32 128, 128
          %1031 = vsyncadd %s1022, %s1030
          %s1032 = smul.addr %s22, 128
          %s1033 = scalar_lea.hbm %s6, %s1032
          %s1035 = sshll.u32 %s1025, 4
          %s1036 = int_to_ptr.vmem [resolvable:$true] %s1035
          %1038 = dma.vmem_to_hbm [thread:$0]  %s1036, 128, %s1033, %s1022
        $region56: #{tpu_custom_call.1} parent=43 // pred_fallthru
          _
      $region44: #{tpu_custom_call.1} parent=5 // pred_fallthru
        _
      %p1039 = scmp.le.s32.totalorder 2, %s17
      // Predicated region
      $region57: #{tpu_custom_call.1} parent=5 // pred_check
        %p1040 = pneg %p1039
      $region58: #{tpu_custom_call.1} parent=5 // pred_check_branch
        %1042 = sbr.rel (%p1040) target = $region60
      $region59: #{tpu_custom_call.1} parent=5 // pred_region
        %s1043 = ssub.s32 %s17, 2
        // Predicated region
        $region61: #{tpu_custom_call.1} parent=59 // pred_check
          %p1044 = pneg %p182
        $region62: #{tpu_custom_call.1} parent=59 // pred_check_branch
          %1046 = sbr.rel (%p1044) target = $region64
        $region63: #{tpu_custom_call.1} parent=59 // pred_region
          %s1047 = sand.u32 %s167, 1
          %s1048 = scalar_lea.sflag [#allocation4], %s1047
          %s1049 = sand.u32 %s167, 1
          %s1050 = smul.addr %s1049, 8
          %s1051 = scalar_lea.vmem [#allocation7], %s1050
          %1052 = dma.done %s1048, 128
        $region64: #{tpu_custom_call.1} parent=59 // pred_fallthru
          _
      $region60: #{tpu_custom_call.1} parent=5 // pred_fallthru
        _
    $region6: #{tpu_custom_call.1} parent=1 // loop_footer
      %s21 = sadd.s32 1, %s17
    $region7: #{tpu_custom_call.1} parent=1 // loop_footer_branch
      %16 = sbr.rel target = $region3
    $region8: #{tpu_custom_call.1} parent=1 // loop_exit
      _
    %1053 = vsyncpa [#allocation3], 1
    %s1054 = scalar_lea.sflag [#allocation3], 1
    %1055 = vsyncpa %s1054, 1
    %1056 = vsyncpa [#allocation6], 1
    %1057 = vsyncpa [#allocation4], 1
    %s1058 = scalar_lea.sflag [#allocation4], 1
    %1059 = vsyncpa %s1058, 1

</llo_original>
